<compile_context>
chip_gen: v5e
topology: v5e:2x2
jax: 0.10.0
libtpu: 0.0.40
codegen_flags: <defaults>
</compile_context>

<pallas_src>
import numpy as np
import jax
import jax.numpy as jnp
from jax.experimental import pallas as pl
from jax.experimental.pallas import tpu as pltpu

# --- Module hyper-parameters (mirrors Moe_layer.__init__) ---
NUM_EXPERTS = 5          # expert_nums
R = 4                    # LoRA rank r
LORA_ALPHA = 8
SCALING = LORA_ALPHA / R # standard LoRA scaling
CIN, COUT = 4, 8         # base_layer = nn.Conv2d(CIN, COUT, 3, stride=1, padding=1)
KH = KW = 3
B, H, W = 2, 16, 16

KD = CIN * KH * KW       # im2col row width (36), (cin, kh, kw) order
KDP = KD + 1             # +1 ones-row for the folded bias


def moe_lora_kernel(w_ref, patch_ref, out_ref):
    """Single invocation, both batch elements (trace-time loop), bias folded into GEMM.

    w_ref    : [B, COUT, KDP]  per-batch effective weight (base + gated LoRA | bias column)
    patch_ref: [B, KDP, HW]    im2col patches (lane-dense, last row = ones)
    out_ref  : [B, COUT, HW]   lane-dense output (reshapes directly to NCHW)
    """
    for b in range(B):  # B=2, trace-time unrolled -> two MXU matmuls, no grid overhead
        out_ref[b, :, :] = jnp.dot(
            w_ref[b, :, :], patch_ref[b, :, :],
            preferred_element_type=jnp.float32,
        ).astype(out_ref.dtype)


def moe_layer_forward(x_nchw, w_base, b_base, lora_a, lora_b, gates):
    """Forward of Moe_layer(base=Conv2d(CIN,COUT,3,1,1)) with gated LoRA experts."""
    Bn, Cin, Hh, Ww = x_nchw.shape
    HW = Hh * Ww  # 256 lanes here (lane-dense; multiple of 128 is ideal but not required)

    # ---- JAX glue: im2col straight from NCHW in (cin, kh, kw) order -> [B, KD, HW] ----
    xp = jnp.pad(x_nchw, ((0, 0), (0, 0), (1, 1), (1, 1)))                 # padding=1 on H, W
    cols = [xp[:, :, i:i + Hh, j:j + Ww] for i in range(KH) for j in range(KW)]
    patches = jnp.stack(cols, axis=2).reshape(Bn, KD, HW)                  # [B, 36, HW]
    ones_row = jnp.ones((Bn, 1, HW), patches.dtype)
    patches_aug = jnp.concatenate([patches, ones_row], axis=1)             # [B, 37, HW]

    # ---- Fold base weight + gated LoRA (+ bias column) into per-batch weight (tiny) ----
    w_base_flat = w_base.reshape(COUT, KD)                                 # [8, 36] (cin,kh,kw)
    a_flat = lora_a.reshape(NUM_EXPERTS, R, KD)                            # [E, R, 36]
    b_flat = lora_b.reshape(NUM_EXPERTS, COUT, R)                          # [E, 8, R]
    delta = jnp.einsum('ecr,erk->eck', b_flat, a_flat)                     # [E, 8, 36] = B_e @ A_e
    w_eff = w_base_flat[None] + SCALING * jnp.einsum('be,eck->bck', gates, delta)  # [B, 8, 36]
    bias_col = jnp.broadcast_to(b_base.reshape(1, COUT, 1), (Bn, COUT, 1))
    w_aug = jnp.concatenate([w_eff, bias_col], axis=2)                     # [B, 8, 37]

    out = pl.pallas_call(
        moe_lora_kernel,
        out_shape=jax.ShapeDtypeStruct((Bn, COUT, HW), jnp.float32),
        in_specs=[
            pl.BlockSpec(memory_space=pltpu.MemorySpace.VMEM),   # full [B, 8, 37] weight
            pl.BlockSpec(memory_space=pltpu.MemorySpace.VMEM),   # full [B, 37, HW] patches
        ],
        out_specs=pl.BlockSpec(memory_space=pltpu.MemorySpace.VMEM),
    )(w_aug, patches_aug)

    # [B, COUT, HW] is already NCHW-ordered — just reshape.
    return out.reshape(Bn, COUT, Hh, Ww)


def reference_forward(x_nchw, w_base, b_base, lora_a, lora_b, gates):
    """Pure-JAX reference (same math as SparseDispatcher dispatch/experts/combine)."""
    dn = ('NCHW', 'OIHW', 'NCHW')
    base = jax.lax.conv_general_dilated(
        x_nchw, w_base, (1, 1), ((1, 1), (1, 1)), dimension_numbers=dn
    ) + b_base.reshape(1, -1, 1, 1)
    out = base
    for e in range(NUM_EXPERTS):
        a = jax.lax.conv_general_dilated(
            x_nchw, lora_a[e], (1, 1), ((1, 1), (1, 1)), dimension_numbers=dn)
        lo = jax.lax.conv_general_dilated(
            a, lora_b[e], (1, 1), ((0, 0), (0, 0)), dimension_numbers=dn)
        out = out + gates[:, e].reshape(-1, 1, 1, 1) * SCALING * lo
    return out


if __name__ == "__main__":
    key = jax.random.PRNGKey(0)
    k = jax.random.split(key, 5)

    x = jax.random.normal(k[0], (B, CIN, H, W), jnp.float32)
    w_base = 0.1 * jax.random.normal(k[1], (COUT, CIN, KH, KW), jnp.float32)
    b_base = 0.1 * jax.random.normal(k[2], (COUT,), jnp.float32)
    lora_a = 0.1 * jax.random.normal(k[3], (NUM_EXPERTS, R, CIN, KH, KW), jnp.float32)
    lora_b = 0.1 * jax.random.normal(k[4], (NUM_EXPERTS, COUT, R, 1, 1), jnp.float32)

    # Sparse gates [B, num_experts]: batch element b routed to expert e iff gates[b,e] > 0,
    # outputs combined weighted by gates (SparseDispatcher.combine semantics).
    gates = jnp.array([[0.6, 0.4, 0.0, 0.0, 0.0],
                       [0.0, 0.0, 0.7, 0.0, 0.3]], jnp.float32)

    # TODO(synk): the `use_lora=False` early-return and the nn.Linear "B != REAL_BATCH_SIZE
    # repeat" branch are host-side control flow, not kernel work; only the Conv2d MoE-LoRA
    # hot path is implemented here.

    out = jax.block_until_ready(moe_layer_forward(x, w_base, b_base, lora_a, lora_b, gates))
    ref = reference_forward(x, w_base, b_base, lora_a, lora_b, gates)
    np.testing.assert_allclose(np.asarray(out), np.asarray(ref), rtol=1e-4, atol=1e-4)
    print("KERNEL_OK")
</pallas_src>

<mosaic_0001>
module attributes {stable_mosaic.version = 11 : i64} {
  func.func @moe_lora_kernel(%arg0: memref<2x8x37xf32, #tpu.memory_space<vmem>>, %arg1: memref<2x37x256xf32, #tpu.memory_space<vmem>>, %arg2: memref<2x8x256xf32, #tpu.memory_space<vmem>>) attributes {dimension_semantics = [], scalar_prefetch = 0 : i64, scratch_operands = 0 : i64, tpu.core_type = #tpu.core_type<tc>} {
    %c0 = arith.constant 0 : index
    %c0_0 = arith.constant 0 : index
    %c0_1 = arith.constant 0 : index
    %0 = vector.load %arg0[%c0, %c0_0, %c0_1] : memref<2x8x37xf32, #tpu.memory_space<vmem>>, vector<1x8x37xf32>
    %1 = vector.shape_cast %0 : vector<1x8x37xf32> to vector<8x37xf32>
    %c0_2 = arith.constant 0 : index
    %c0_3 = arith.constant 0 : index
    %c0_4 = arith.constant 0 : index
    %2 = vector.load %arg1[%c0_2, %c0_3, %c0_4] : memref<2x37x256xf32, #tpu.memory_space<vmem>>, vector<1x37x256xf32>
    %3 = vector.shape_cast %2 : vector<1x37x256xf32> to vector<37x256xf32>
    %cst = arith.constant dense<0.000000e+00> : vector<8x256xf32>
    %4 = tpu.matmul %1, %3, %cst {dimension_numbers = #tpu.dot_dimension_numbers<[1], [0], [0], [1], [0, 0, 1, 1], [], []>} : vector<8x37xf32>, vector<37x256xf32>, vector<8x256xf32> -> vector<8x256xf32>
    %c0_5 = arith.constant 0 : index
    %c0_6 = arith.constant 0 : index
    %c0_7 = arith.constant 0 : index
    %5 = vector.load %arg2[%c0_5, %c0_6, %c0_7] : memref<2x8x256xf32, #tpu.memory_space<vmem>>, vector<1x8x256xf32>
    %6 = vector.shape_cast %5 : vector<1x8x256xf32> to vector<8x256xf32>
    %7 = vector.shape_cast %4 : vector<8x256xf32> to vector<1x8x256xf32>
    tpu.vector_store %arg2[%c0_5, %c0_6, %c0_7], %7 {strides = array<i32>} : memref<2x8x256xf32, #tpu.memory_space<vmem>>, vector<1x8x256xf32>,
    %c1 = arith.constant 1 : index
    %c0_8 = arith.constant 0 : index
    %c0_9 = arith.constant 0 : index
    %8 = vector.load %arg0[%c1, %c0_8, %c0_9] : memref<2x8x37xf32, #tpu.memory_space<vmem>>, vector<1x8x37xf32>
    %9 = vector.shape_cast %8 : vector<1x8x37xf32> to vector<8x37xf32>
    %c1_10 = arith.constant 1 : index
    %c0_11 = arith.constant 0 : index
    %c0_12 = arith.constant 0 : index
    %10 = vector.load %arg1[%c1_10, %c0_11, %c0_12] : memref<2x37x256xf32, #tpu.memory_space<vmem>>, vector<1x37x256xf32>
    %11 = vector.shape_cast %10 : vector<1x37x256xf32> to vector<37x256xf32>
    %cst_13 = arith.constant dense<0.000000e+00> : vector<8x256xf32>
    %12 = tpu.matmul %9, %11, %cst_13 {dimension_numbers = #tpu.dot_dimension_numbers<[1], [0], [0], [1], [0, 0, 1, 1], [], []>} : vector<8x37xf32>, vector<37x256xf32>, vector<8x256xf32> -> vector<8x256xf32>
    %c1_14 = arith.constant 1 : index
    %c0_15 = arith.constant 0 : index
    %c0_16 = arith.constant 0 : index
    %13 = vector.load %arg2[%c1_14, %c0_15, %c0_16] : memref<2x8x256xf32, #tpu.memory_space<vmem>>, vector<1x8x256xf32>
    %14 = vector.shape_cast %13 : vector<1x8x256xf32> to vector<8x256xf32>
    %15 = vector.shape_cast %12 : vector<8x256xf32> to vector<1x8x256xf32>
    tpu.vector_store %arg2[%c1_14, %c0_15, %c0_16], %15 {strides = array<i32>} : memref<2x8x256xf32, #tpu.memory_space<vmem>>, vector<1x8x256xf32>,
    return
  }
}

</mosaic_0001>

<llo_original>
// kernel: tpu_custom_call.1
$region0: #{tpu_custom_call.1}
  #allocation0 [shape = 'u32[]', space=smem, size = 0x4, offset = 0x4, fixed_abs, tag = 'smem constant byte address 0x4 - core index']
  #allocation1 [shape = 'u32[72,128]{1,0:T(1,128)}', space=vmem, size = 0x9000, scoped, tag = 'internal scratch']
  %s0 = inlined_call_operand.vmem [shape: f32[2,8,37], index: 0, kind: input, shape index: {}]
  %s1 = inlined_call_operand.vmem [shape: f32[2,37,256], index: 1, kind: input, shape index: {}]
  %s2 = inlined_call_operand.hbm [shape: f32[2,8,256], index: 2, kind: output, shape index: {}]
  %s3 = sld [smem:[#allocation0]]
  $region18: #{tpu_custom_call.1} parent=0
    _
  %s5 = ssub.s32 1, %s3
  %s6 = scalar_select 0, %s5, %s3
  $region1: #{tpu_custom_call.1} parent=0
    #allocation2 [shape = 'u8[16384]{0}', space=vmem, size = 0x4000, scoped, tag = 'output window, operand 0, single buffered']
    #allocation3 [shape = 's32[1]{0}', space=sflag, size = 0x4, scoped, tag = 'scoped memory for tpu_custom_call.1']
    %7 = vsyncpa [#allocation3], 0
    // Predicated region
    $region2: #{tpu_custom_call.1} parent=1 // pred_check
      _
    $region3: #{tpu_custom_call.1} parent=1 // pred_check_branch
      %9 = sbr.rel (0) target = $region5
    $region4: #{tpu_custom_call.1} parent=1 // pred_region
      _
    $region5: #{tpu_custom_call.1} parent=1 // pred_fallthru
      _
    // Predicated region
    $region6: #{tpu_custom_call.1} parent=1 // pred_check
      _
    $region7: #{tpu_custom_call.1} parent=1 // pred_check_branch
      %11 = sbr.rel (0) target = $region9
    $region8: #{tpu_custom_call.1} parent=1 // pred_region
      _
    $region9: #{tpu_custom_call.1} parent=1 // pred_fallthru
      _
    %v12 = vld [vmem:[%s0] sm:$0xff]
    %v13 = vld [vmem:[%s1] sm:$0xff]
    %v14 = vld [vmem:[%s1 + $0x8] sm:$0xff]
    %v15 = vld [vmem:[%s1 + $0x10] sm:$0xff]
    %v16 = vld [vmem:[%s1 + $0x18] sm:$0xff]
    %v17 = vld [vmem:[%s1 + $0x20] sm:$0xff]
    %v18 = vld [vmem:[%s1 + $0x28] sm:$0xff]
    %v19 = vld [vmem:[%s1 + $0x30] sm:$0xff]
    %v20 = vld [vmem:[%s1 + $0x38] sm:$0xff]
    %v21 = vld [vmem:[%s1 + $0x40] sm:$0x1f]
    %v22 = vld [vmem:[%s1 + $0x48] sm:$0x1f]
    %vm23 = vcmask 302080
    %v25 = vsel %vm23, %v12, 0
    %vm27 = vcmask 1044480
    %v29 = vsel %vm27, %v21, 0
    %v32 = vsel %vm27, %v22, 0
    %34 = vmatpush.msra.mxu0 0.0
    %35 = vmatpush.msra.mxu0 0.0
    %36 = vmatpush.msra.mxu0 0.0
    %37 = vmatpush.msra.mxu0 0.0
    %38 = vmatpush.msra.mxu0 0.0
    %39 = vmatpush.msra.mxu0 0.0
    %40 = vmatpush.msra.mxu0 0.0
    %41 = vmatpush.msra.mxu0 0.0
    %42 = vmatpush.msra.mxu0 0.0
    %43 = vmatpush.msra.mxu0 0.0
    %44 = vmatpush.msra.mxu0 0.0
    %45 = vmatpush.msra.mxu0 %v29
    %46 = vmatpush.msra.mxu0 %v19
    %47 = vmatpush.msra.mxu0 %v17
    %48 = vmatpush.msra.mxu0 %v15
    %49 = vmatpush.msra.mxu0 %v13
    %50 = vmatmul.f32.gmra.mxu0 %v25
    %v51 = vpop.f32.mrf.mxu0
    %v52 = vadd.f32 0.0, %v51
    %53 = vdwg.mxu0
    %54 = vmatpush.msra.mxu0 0.0
    %55 = vmatpush.msra.mxu0 0.0
    %56 = vmatpush.msra.mxu0 0.0
    %57 = vmatpush.msra.mxu0 0.0
    %58 = vmatpush.msra.mxu0 0.0
    %59 = vmatpush.msra.mxu0 0.0
    %60 = vmatpush.msra.mxu0 0.0
    %61 = vmatpush.msra.mxu0 0.0
    %62 = vmatpush.msra.mxu0 0.0
    %63 = vmatpush.msra.mxu0 0.0
    %64 = vmatpush.msra.mxu0 0.0
    %65 = vmatpush.msra.mxu0 %v32
    %66 = vmatpush.msra.mxu0 %v20
    %67 = vmatpush.msra.mxu0 %v18
    %68 = vmatpush.msra.mxu0 %v16
    %69 = vmatpush.msra.mxu0 %v14
    %70 = vmatmul.f32.gmra.mxu0 %v25
    %v71 = vpop.f32.mrf.mxu0
    %v72 = vadd.f32 0.0, %v71
    %73 = vdwg.mxu0
    %74 = vst [vmem:[#allocation2] sm:$0xff] %v52
    %75 = vst [vmem:[#allocation2 + $0x8] sm:$0xff] %v72
    %s76 = scalar_lea.vmem %s0, 8
    %v77 = vld [vmem:[%s76] sm:$0xff]
    %s78 = scalar_lea.vmem %s1, 80
    %v79 = vld [vmem:[%s78] sm:$0xff]
    %v80 = vld [vmem:[%s78 + $0x8] sm:$0xff]
    %v81 = vld [vmem:[%s78 + $0x10] sm:$0xff]
    %v82 = vld [vmem:[%s78 + $0x18] sm:$0xff]
    %v83 = vld [vmem:[%s78 + $0x20] sm:$0xff]
    %v84 = vld [vmem:[%s78 + $0x28] sm:$0xff]
    %v85 = vld [vmem:[%s78 + $0x30] sm:$0xff]
    %v86 = vld [vmem:[%s78 + $0x38] sm:$0xff]
    %v87 = vld [vmem:[%s78 + $0x40] sm:$0x1f]
    %v88 = vld [vmem:[%s78 + $0x48] sm:$0x1f]
    %v90 = vsel %vm23, %v77, 0
    %v93 = vsel %vm27, %v87, 0
    %v96 = vsel %vm27, %v88, 0
    %98 = vmatpush.msra.mxu0 0.0
    %99 = vmatpush.msra.mxu0 0.0
    %100 = vmatpush.msra.mxu0 0.0
    %101 = vmatpush.msra.mxu0 0.0
    %102 = vmatpush.msra.mxu0 0.0
    %103 = vmatpush.msra.mxu0 0.0
    %104 = vmatpush.msra.mxu0 0.0
    %105 = vmatpush.msra.mxu0 0.0
    %106 = vmatpush.msra.mxu0 0.0
    %107 = vmatpush.msra.mxu0 0.0
    %108 = vmatpush.msra.mxu0 0.0
    %109 = vmatpush.msra.mxu0 %v93
    %110 = vmatpush.msra.mxu0 %v85
    %111 = vmatpush.msra.mxu0 %v83
    %112 = vmatpush.msra.mxu0 %v81
    %113 = vmatpush.msra.mxu0 %v79
    %114 = vmatmul.f32.gmra.mxu0 %v90
    %v115 = vpop.f32.mrf.mxu0
    %v116 = vadd.f32 0.0, %v115
    %117 = vdwg.mxu0
    %118 = vmatpush.msra.mxu0 0.0
    %119 = vmatpush.msra.mxu0 0.0
    %120 = vmatpush.msra.mxu0 0.0
    %121 = vmatpush.msra.mxu0 0.0
    %122 = vmatpush.msra.mxu0 0.0
    %123 = vmatpush.msra.mxu0 0.0
    %124 = vmatpush.msra.mxu0 0.0
    %125 = vmatpush.msra.mxu0 0.0
    %126 = vmatpush.msra.mxu0 0.0
    %127 = vmatpush.msra.mxu0 0.0
    %128 = vmatpush.msra.mxu0 0.0
    %129 = vmatpush.msra.mxu0 %v96
    %130 = vmatpush.msra.mxu0 %v86
    %131 = vmatpush.msra.mxu0 %v84
    %132 = vmatpush.msra.mxu0 %v82
    %133 = vmatpush.msra.mxu0 %v80
    %134 = vmatmul.f32.gmra.mxu0 %v90
    %v135 = vpop.f32.mrf.mxu0
    %v136 = vadd.f32 0.0, %v135
    %137 = vdwg.mxu0
    %s138 = scalar_lea.vmem [#allocation2], 16
    %139 = vst [vmem:[%s138] sm:$0xff] %v116
    %140 = vst [vmem:[%s138 + $0x8] sm:$0xff] %v136
    // Predicated region
    $region10: #{tpu_custom_call.1} parent=1 // pred_check
      _
    $region11: #{tpu_custom_call.1} parent=1 // pred_check_branch
      %142 = sbr.rel (0) target = $region13
    $region12: #{tpu_custom_call.1} parent=1 // pred_region
      %144 = vsyncadd [#allocation3], 0
      %s145 = sshll.u32 [#allocation2], 4
      %s146 = int_to_ptr.vmem [resolvable:$true] %s145
      %s147 = sshll.u32 %s2, 4
      %s148 = int_to_ptr.hbm [resolvable:$true] %s147
      %153 = dma.vmem_to_hbm [thread:$0]  %s146, 512, %s148, [#allocation3], 256, 256, 16
    $region13: #{tpu_custom_call.1} parent=1 // pred_fallthru
      _
    // Predicated region
    $region14: #{tpu_custom_call.1} parent=1 // pred_check
      _
    $region15: #{tpu_custom_call.1} parent=1 // pred_check_branch
      %155 = sbr.rel (0) target = $region17
    $region16: #{tpu_custom_call.1} parent=1 // pred_region
      %157 = dma.done [#allocation3], 512
    $region17: #{tpu_custom_call.1} parent=1 // pred_fallthru
      _
    %158 = vsyncpa [#allocation3], 1

</llo_original>
